<compile_context>
chip_gen: v6e
topology: v6e:2x2x1
jax: 0.10.0
libtpu: 0.0.40
codegen_flags: <defaults>
</compile_context>

<pallas_src>
import functools

import jax
import jax.numpy as jnp
from jax.experimental import pallas as pl
from jax.experimental.pallas import tpu as pltpu


def _round_up(n, m):
    return ((n + m - 1) // m) * m


def _fastnn_kernel(x_ref, w1_ref, b1_ref, w2_ref, b2_ref, w3_ref, b3_ref, o_ref):
    """Fused MLP forward for one batch tile (everything resident in VMEM)."""
    # Layer 1: Linear(156 -> 64) + ReLU.  (BN1 folded into layer 2; Dropout = id.)
    h1 = jnp.dot(x_ref[...], w1_ref[...],
                 preferred_element_type=jnp.float32) + b1_ref[...]
    h1 = jnp.maximum(h1, 0.0)

    # Layer 2: Linear(64 -> 32) with BN1 folded in, + ReLU.  (BN2 folded into layer 3.)
    h1 = h1.astype(w2_ref.dtype)
    h2 = jnp.dot(h1, w2_ref[...],
                 preferred_element_type=jnp.float32) + b2_ref[...]
    h2 = jnp.maximum(h2, 0.0)

    # Layer 3: Linear(32 -> 1) with BN2 folded in, + Sigmoid.
    # Computed transposed so the store is lane-dense: (1, batch_tile) with the
    # batch dimension on the 128-lane axis (the transpose rides the idle XLU).
    h2_t = h2.T                                               # (H2, batch_tile)
    logits = jnp.dot(w3_ref[...].astype(jnp.float32), h2_t,
                     preferred_element_type=jnp.float32) + b3_ref[...]
    # Exact sigmoid: exp goes to the (idle) EUP, the divide to the VPU; both
    # units have slack in this HBM-bound kernel, so exactness is free.
    sig = 1.0 / (1.0 + jnp.exp(-logits))
    o_ref[...] = sig.reshape(o_ref.shape).astype(o_ref.dtype)


@functools.partial(jax.jit, static_argnames=("batch_tile", "x_buffers"))
def fastnn_forward(x, params, batch_tile=2048, x_buffers=2):
    """Fused FastNNModel eval-mode forward pass as a single Pallas TPU kernel.

    x:      (B, input_features); runs in x's dtype (f32 or bf16-at-rest).
    params: dict of FOLDED parameters (see fold_params).  Weight dtype should
            match x's dtype (fold once, outside jit).
    batch_tile: max rows per grid step (rounded up to a multiple of 128).
    x_buffers:  pipeline depth for the x tile (2 = standard double buffer;
                3 is a cheap sweep knob if the DMA issue latency peeks out).
    """
    B, F = x.shape
    w1t = params["w1t"]          # (F, H1)
    b1 = params["b1"]            # (1, H1) f32
    w2t = params["w2t"]          # (H1, H2), BN1 folded
    b2 = params["b2"]            # (1, H2) f32
    w3r = params["w3r"]          # (1, H2), BN2 folded, row layout
    b3 = params["b3"]            # (1, 1) f32
    H1 = w1t.shape[1]
    H2 = w2t.shape[1]

    # --- Tile selection -----------------------------------------------------
    # * multiple of 128 -> lane-dense (unmasked) output stores.
    # * aim for >= 4 grid steps when B permits (>= 2 per v7x TensorCore), so
    #   the x DMA overlaps the previous step's compute on every core.
    batch_tile = max(128, _round_up(batch_tile, 128))
    target = max(128, _round_up(pl.cdiv(B, 4), 128))
    tile = min(batch_tile, target)
    num_tiles = pl.cdiv(B, tile)     # partial last block; NO padded copy of x

    itemsize = jnp.dtype(x.dtype).itemsize
    cost = pl.CostEstimate(
        flops=2 * num_tiles * tile * (F * H1 + H1 * H2 + H2),
        transcendentals=num_tiles * tile,                      # one exp per row
        bytes_accessed=(B * F * itemsize                       # x (streamed)
                        + num_tiles * tile * 4                 # output
                        + (F * H1 + H1 * H2 + H2) * w1t.dtype.itemsize
                        + (H1 + H2 + 1) * 4),                  # biases
    )

    if x_buffers == 2:
        x_spec = pl.BlockSpec((tile, F), lambda i: (i, 0))
    else:
        x_spec = pl.BlockSpec((tile, F), lambda i: (i, 0),
                              pipeline_mode=pl.Buffered(x_buffers))

    const = lambda shape: pl.BlockSpec(shape, lambda i: (0,) * len(shape))

    out = pl.pallas_call(
        _fastnn_kernel,
        out_shape=jax.ShapeDtypeStruct((num_tiles, 1, tile), jnp.float32),
        grid_spec=pltpu.PrefetchScalarGridSpec(
            num_scalar_prefetch=0,
            grid=(num_tiles,),
            in_specs=[
                x_spec,                                        # x tile (per-step)
                const((F, H1)), const((1, H1)),                # layer 1
                const((H1, H2)), const((1, H2)),               # layer 2 (BN1 folded)
                const((1, H2)), const((1, 1)),                 # layer 3 (BN2 folded)
            ],
            out_specs=pl.BlockSpec((1, 1, tile), lambda i: (i, 0, 0)),
        ),
        compiler_params=pltpu.CompilerParams(
            dimension_semantics=("parallel",)),
        cost_estimate=cost,
    )(x, w1t, b1, w2t, b2, w3r, b3)

    # Lane-dense (num_tiles, 1, tile) layout -> (B, 1).  Rows >= B of the last
    # tile are garbage by design (partial input block) and are dropped here.
    return out.reshape(num_tiles * tile)[:B].reshape(B, 1)


def init_raw_params(key, input_features=156, hidden_size=64):
    """Deterministic synthetic parameters with FastNNModel shapes (PyTorch layout)."""
    h2 = hidden_size // 2
    ks = jax.random.split(key, 14)
    return {
        # Linear weights are (out, in) as in PyTorch.
        "W1": jax.random.normal(ks[0], (hidden_size, input_features), jnp.float32) * 0.05,
        "b1": jax.random.normal(ks[1], (hidden_size,), jnp.float32) * 0.05,
        "W2": jax.random.normal(ks[2], (h2, hidden_size), jnp.float32) * 0.05,
        "b2": jax.random.normal(ks[3], (h2,), jnp.float32) * 0.05,
        "W3": jax.random.normal(ks[4], (1, h2), jnp.float32) * 0.05,
        "b3": jax.random.normal(ks[5], (1,), jnp.float32) * 0.05,
        # Non-trivial BatchNorm params / running stats so the folding is exercised.
        "g1": 1.0 + 0.1 * jax.random.normal(ks[6], (hidden_size,), jnp.float32),
        "be1": 0.1 * jax.random.normal(ks[7], (hidden_size,), jnp.float32),
        "rm1": 0.05 * jax.random.normal(ks[8], (hidden_size,), jnp.float32),
        "rv1": 1.0 + 0.1 * jnp.abs(jax.random.normal(ks[9], (hidden_size,), jnp.float32)),
        "g2": 1.0 + 0.1 * jax.random.normal(ks[10], (h2,), jnp.float32),
        "be2": 0.1 * jax.random.normal(ks[11], (h2,), jnp.float32),
        "rm2": 0.05 * jax.random.normal(ks[12], (h2,), jnp.float32),
        "rv2": 1.0 + 0.1 * jnp.abs(jax.random.normal(ks[13], (h2,), jnp.float32)),
    }


def fold_params(raw, eps=1e-5, dtype=jnp.float32):
    """Fold eval-mode BatchNorm affines into the *following* Linear layer.

    Call ONCE, outside jit.  `dtype` is the weight storage/compute dtype (use
    bf16 only when the activations x are bf16 at rest); biases stay f32 since
    they add onto f32 accumulators.
    """
    s1 = raw["g1"] / jnp.sqrt(raw["rv1"] + eps)
    t1 = raw["be1"] - raw["rm1"] * s1
    s2 = raw["g2"] / jnp.sqrt(raw["rv2"] + eps)
    t2 = raw["be2"] - raw["rm2"] * s2

    w1t = raw["W1"].T                                   # (F, H1)
    w2t = s1[:, None] * raw["W2"].T                     # (H1, H2)  BN1 folded
    b2 = raw["b2"] + t1 @ raw["W2"].T                   # (H2,)
    w3r = raw["W3"] * s2[None, :]                       # (1, H2)   BN2 folded (row)
    b3 = raw["b3"] + t2 @ raw["W3"].T                   # (1,)

    return {
        "w1t": w1t.astype(dtype), "b1": raw["b1"].reshape(1, -1).astype(jnp.float32),
        "w2t": w2t.astype(dtype), "b2": b2.reshape(1, -1).astype(jnp.float32),
        "w3r": w3r.astype(dtype), "b3": b3.reshape(1, 1).astype(jnp.float32),
    }


def _reference_forward(x, raw, eps=1e-5):
    """Pure-JAX reference of the original (unfolded) eval-mode forward."""
    h = jnp.maximum(x @ raw["W1"].T + raw["b1"], 0.0)
    h = (h - raw["rm1"]) / jnp.sqrt(raw["rv1"] + eps) * raw["g1"] + raw["be1"]
    h = jnp.maximum(h @ raw["W2"].T + raw["b2"], 0.0)
    h = (h - raw["rm2"]) / jnp.sqrt(raw["rv2"] + eps) * raw["g2"] + raw["be2"]
    return jax.nn.sigmoid(h @ raw["W3"].T + raw["b3"])
    # Dropout is the identity in eval mode, so it is omitted.


if __name__ == "__main__":
    key = jax.random.PRNGKey(0)
    k_x, k_p = jax.random.split(key)

    F, H = 156, 64
    raw = init_raw_params(k_p, input_features=F, hidden_size=H)
    params_f32 = fold_params(raw)                      # fold once, outside jit

    # Ragged batch (not a multiple of the tile): exercises the partial last
    # block (no host-side pad) and a 4-step grid (>= 2 steps per v7x TC).
    B = 1000
    x = jax.random.normal(k_x, (B, F), jnp.float32)
    ref = _reference_forward(x, raw)

    # f32 path (default; also the recommended path on v5e).
    out_f32 = jax.block_until_ready(fastnn_forward(x, params_f32))
    assert out_f32.shape == (B, 1)
    assert jnp.allclose(out_f32, ref, atol=5e-3, rtol=5e-3), "f32 mismatch vs reference"

    # bf16-at-rest path: x is bf16 BEFORE entering the wrapper (producer-side
    # cast, outside this jit) and weights were folded once in bf16, so there is
    # no hidden extra HBM cast pass over x inside the pipeline.
    params_bf16 = fold_params(raw, dtype=jnp.bfloat16)
    x_bf16 = jax.block_until_ready(x.astype(jnp.bfloat16))
    out_bf16 = jax.block_until_ready(fastnn_forward(x_bf16, params_bf16))
    assert out_bf16.shape == (B, 1)
    assert jnp.allclose(out_bf16, ref, atol=2e-2, rtol=2e-2), "bf16 mismatch vs reference"

    # Tiny batch: single 128-row tile, partial input block (tail rows are
    # garbage by design and sliced off).
    B_small = 8
    out_small = jax.block_until_ready(fastnn_forward(x[:B_small], params_f32))
    assert out_small.shape == (B_small, 1)
    assert jnp.allclose(out_small, ref[:B_small], atol=5e-3, rtol=5e-3), "small-batch mismatch"

    print("KERNEL_OK")
</pallas_src>

<mosaic_0001>
module attributes {stable_mosaic.version = 11 : i64} {
  func.func @_fastnn_kernel(%arg0: i32, %arg1: memref<256x156xf32, #tpu.memory_space<vmem>>, %arg2: memref<156x64xf32, #tpu.memory_space<vmem>>, %arg3: memref<1x64xf32, #tpu.memory_space<vmem>>, %arg4: memref<64x32xf32, #tpu.memory_space<vmem>>, %arg5: memref<1x32xf32, #tpu.memory_space<vmem>>, %arg6: memref<1x32xf32, #tpu.memory_space<vmem>>, %arg7: memref<1x1xf32, #tpu.memory_space<vmem>>, %arg8: memref<1x1x256xf32, #tpu.memory_space<vmem>>) attributes {dimension_semantics = [#tpu.dimension_semantics<parallel>], iteration_bounds = array<i64: 4>, scalar_prefetch = 0 : i64, scratch_operands = 0 : i64, tpu.core_type = #tpu.core_type<tc>, window_params = [{transform_indices = @transform_0, window_bounds = array<i64: 256, 156>}, {pipeline_mode = #tpu.pipeline_mode<synchronous>, transform_indices = @transform_1, window_bounds = array<i64: 156, 64>}, {pipeline_mode = #tpu.pipeline_mode<synchronous>, transform_indices = @transform_2, window_bounds = array<i64: 1, 64>}, {pipeline_mode = #tpu.pipeline_mode<synchronous>, transform_indices = @transform_3, window_bounds = array<i64: 64, 32>}, {pipeline_mode = #tpu.pipeline_mode<synchronous>, transform_indices = @transform_4, window_bounds = array<i64: 1, 32>}, {pipeline_mode = #tpu.pipeline_mode<synchronous>, transform_indices = @transform_5, window_bounds = array<i64: 1, 32>}, {pipeline_mode = #tpu.pipeline_mode<synchronous>, transform_indices = @transform_6, window_bounds = array<i64: 1, 1>}, {transform_indices = @transform_7, window_bounds = array<i64: 1, 1, 256>}]} {
    %c0 = arith.constant 0 : index
    %c0_0 = arith.constant 0 : index
    %0 = vector.load %arg1[%c0, %c0_0] : memref<256x156xf32, #tpu.memory_space<vmem>>, vector<256x156xf32>
    %c0_1 = arith.constant 0 : index
    %c0_2 = arith.constant 0 : index
    %1 = vector.load %arg2[%c0_1, %c0_2] : memref<156x64xf32, #tpu.memory_space<vmem>>, vector<156x64xf32>
    %cst = arith.constant dense<0.000000e+00> : vector<256x64xf32>
    %2 = tpu.matmul %0, %1, %cst {dimension_numbers = #tpu.dot_dimension_numbers<[1], [0], [0], [1], [0, 0, 1, 1], [], []>} : vector<256x156xf32>, vector<156x64xf32>, vector<256x64xf32> -> vector<256x64xf32>
    %c0_3 = arith.constant 0 : index
    %c0_4 = arith.constant 0 : index
    %3 = vector.load %arg3[%c0_3, %c0_4] : memref<1x64xf32, #tpu.memory_space<vmem>>, vector<1x64xf32>
    %4 = vector.broadcast %3 : vector<1x64xf32> to vector<256x64xf32>
    %5 = arith.addf %2, %4 : vector<256x64xf32>
    %cst_5 = arith.constant 0.000000e+00 : f32
    %6 = vector.broadcast %cst_5 : f32 to vector<256x64xf32>
    %7 = arith.maximumf %5, %6 : vector<256x64xf32>
    %c0_6 = arith.constant 0 : index
    %c0_7 = arith.constant 0 : index
    %8 = vector.load %arg4[%c0_6, %c0_7] : memref<64x32xf32, #tpu.memory_space<vmem>>, vector<64x32xf32>
    %cst_8 = arith.constant dense<0.000000e+00> : vector<256x32xf32>
    %9 = tpu.matmul %7, %8, %cst_8 {dimension_numbers = #tpu.dot_dimension_numbers<[1], [0], [0], [1], [0, 0, 1, 1], [], []>} : vector<256x64xf32>, vector<64x32xf32>, vector<256x32xf32> -> vector<256x32xf32>
    %c0_9 = arith.constant 0 : index
    %c0_10 = arith.constant 0 : index
    %10 = vector.load %arg5[%c0_9, %c0_10] : memref<1x32xf32, #tpu.memory_space<vmem>>, vector<1x32xf32>
    %11 = vector.broadcast %10 : vector<1x32xf32> to vector<256x32xf32>
    %12 = arith.addf %9, %11 : vector<256x32xf32>
    %cst_11 = arith.constant 0.000000e+00 : f32
    %13 = vector.broadcast %cst_11 : f32 to vector<256x32xf32>
    %14 = arith.maximumf %12, %13 : vector<256x32xf32>
    %15 = tpu.transpose %14, [1, 0] : vector<256x32xf32> -> vector<32x256xf32>
    %c0_12 = arith.constant 0 : index
    %c0_13 = arith.constant 0 : index
    %16 = vector.load %arg6[%c0_12, %c0_13] : memref<1x32xf32, #tpu.memory_space<vmem>>, vector<1x32xf32>
    %cst_14 = arith.constant dense<0.000000e+00> : vector<1x256xf32>
    %17 = tpu.matmul %16, %15, %cst_14 {dimension_numbers = #tpu.dot_dimension_numbers<[1], [0], [0], [1], [0, 0, 1, 1], [], []>} : vector<1x32xf32>, vector<32x256xf32>, vector<1x256xf32> -> vector<1x256xf32>
    %c0_15 = arith.constant 0 : index
    %c0_16 = arith.constant 0 : index
    %18 = vector.load %arg7[%c0_15, %c0_16] : memref<1x1xf32, #tpu.memory_space<vmem>>, vector<1x1xf32>
    %19 = vector.broadcast %18 : vector<1x1xf32> to vector<1x256xf32>
    %20 = arith.addf %17, %19 : vector<1x256xf32>
    %cst_17 = arith.constant 0.000000e+00 : f32
    %21 = vector.broadcast %cst_17 : f32 to vector<1x256xf32>
    %22 = arith.subf %21, %20 : vector<1x256xf32>
    %23 = math.exp %22 : vector<1x256xf32>
    %cst_18 = arith.constant 1.000000e+00 : f32
    %24 = vector.broadcast %cst_18 : f32 to vector<1x256xf32>
    %25 = arith.addf %24, %23 : vector<1x256xf32>
    %cst_19 = arith.constant 1.000000e+00 : f32
    %26 = vector.broadcast %cst_19 : f32 to vector<1x256xf32>
    %27 = arith.divf %26, %25 : vector<1x256xf32>
    %28 = vector.shape_cast %27 : vector<1x256xf32> to vector<1x1x256xf32>
    %c0_20 = arith.constant 0 : index
    %c0_21 = arith.constant 0 : index
    %c0_22 = arith.constant 0 : index
    %29 = vector.load %arg8[%c0_20, %c0_21, %c0_22] : memref<1x1x256xf32, #tpu.memory_space<vmem>>, vector<1x1x256xf32>
    tpu.vector_store %arg8[%c0_20, %c0_21, %c0_22], %28 {strides = array<i32>} : memref<1x1x256xf32, #tpu.memory_space<vmem>>, vector<1x1x256xf32>,
    return
  }
  func.func @transform_0(%arg0: i32) -> (i32, i32) {
    %c0_i32 = arith.constant 0 : i32
    %c0_i32_0 = arith.constant 0 : i32
    return %arg0, %c0_i32 : i32, i32
  }
  func.func @transform_1(%arg0: i32) -> (i32, i32) {
    %c0_i32 = arith.constant 0 : i32
    %c0_i32_0 = arith.constant 0 : i32
    %c0_i32_1 = arith.constant 0 : i32
    return %c0_i32, %c0_i32_0 : i32, i32
  }
  func.func @transform_2(%arg0: i32) -> (i32, i32) {
    %c0_i32 = arith.constant 0 : i32
    %c0_i32_0 = arith.constant 0 : i32
    %c0_i32_1 = arith.constant 0 : i32
    return %c0_i32, %c0_i32_0 : i32, i32
  }
  func.func @transform_3(%arg0: i32) -> (i32, i32) {
    %c0_i32 = arith.constant 0 : i32
    %c0_i32_0 = arith.constant 0 : i32
    %c0_i32_1 = arith.constant 0 : i32
    return %c0_i32, %c0_i32_0 : i32, i32
  }
  func.func @transform_4(%arg0: i32) -> (i32, i32) {
    %c0_i32 = arith.constant 0 : i32
    %c0_i32_0 = arith.constant 0 : i32
    %c0_i32_1 = arith.constant 0 : i32
    return %c0_i32, %c0_i32_0 : i32, i32
  }
  func.func @transform_5(%arg0: i32) -> (i32, i32) {
    %c0_i32 = arith.constant 0 : i32
    %c0_i32_0 = arith.constant 0 : i32
    %c0_i32_1 = arith.constant 0 : i32
    return %c0_i32, %c0_i32_0 : i32, i32
  }
  func.func @transform_6(%arg0: i32) -> (i32, i32) {
    %c0_i32 = arith.constant 0 : i32
    %c0_i32_0 = arith.constant 0 : i32
    %c0_i32_1 = arith.constant 0 : i32
    return %c0_i32, %c0_i32_0 : i32, i32
  }
  func.func @transform_7(%arg0: i32) -> (i32, i32, i32) {
    %c0_i32 = arith.constant 0 : i32
    %c0_i32_0 = arith.constant 0 : i32
    %c0_i32_1 = arith.constant 0 : i32
    return %arg0, %c0_i32, %c0_i32_0 : i32, i32, i32
  }
}

</mosaic_0001>

<llo_original>
// kernel: fastnn_forward.1
$region0: #{fastnn_forward.1}
  #allocation0 [shape = 'u32[]', space=smem, size = 0x4, offset = 0x4, fixed_abs, tag = 'smem constant byte address 0x4 - core index']
  #allocation1 [shape = 'u32[144,128]{1,0:T(1,128)}', space=vmem, size = 0x12000, scoped, tag = 'internal scratch']
  #allocation2 [shape = 'f32[1,1]{1,0:T(1,128)S(1)}', space=vmem, size = 0x200, scoped, tag = 'scoped memory for fastnn_forward.1']
  %s0 = inlined_call_operand.vmem [shape: f32[1000,156], index: 0, kind: input, shape index: {}]
  %s1 = inlined_call_operand.vmem [shape: f32[156,64], index: 1, kind: input, shape index: {}]
  %s2 = inlined_call_operand.vmem [shape: f32[1,64], index: 2, kind: input, shape index: {}]
  %s3 = inlined_call_operand.vmem [shape: f32[64,32], index: 3, kind: input, shape index: {}]
  %s4 = inlined_call_operand.vmem [shape: f32[1,32], index: 4, kind: input, shape index: {}]
  %s5 = inlined_call_operand.vmem [shape: f32[1,32], index: 5, kind: input, shape index: {}]
  %s6 = inlined_call_operand.<no memory space> [shape: f32[1,1], index: 6, kind: input, shape index: {}]
  %s7 = inlined_call_operand.hbm [shape: f32[4,1,256], index: 7, kind: output, shape index: {}]
  %s8 = sld [smem:[#allocation0]]
  $region61: #{fastnn_forward.1} parent=0
    _
  %s10 = ssub.s32 1, %s8
  %s11 = scalar_select 0, %s10, %s8
  %v12 = vstv %s6
  %13 = vst [vmem:[#allocation2] sm:$0x1] %v12
  $region1: #{fastnn_forward.1} parent=0
    #allocation3 [shape = 'u8[2048]{0}', space=vmem, size = 0x800, scoped, tag = 'output window, operand 0']
    #allocation4 [shape = 's32[2]{0}', space=sflag, size = 0x8, scoped, tag = 'scoped memory for fastnn_forward.1']
    %14 = vsyncpa [#allocation4], 0
    %s15 = scalar_lea.sflag [#allocation4], 1
    %16 = vsyncpa %s15, 0
    loop: start=0, step=1, limit=6
    $region2: #{fastnn_forward.1} parent=1 // loop_pre_header
      _
    $region3: #{fastnn_forward.1} parent=1 // loop_header
      %s18 = sphi 0, %s22
      %p19 = scmp.ge.s32.totalorder %s18, 6
      %s28 = sphi 0, %s30
      %s31 = sphi 0, %s28
      %s32 = sphi 0, %s31
      %s48 = sphi 0, %s32
      %s52 = sphi 0, %s52
      %s54 = sphi 0, %s52
      %s55 = sphi 0, %s54
      %s69 = sphi 0, %s55
      %s73 = sphi 0, %s73
      %s75 = sphi 0, %s73
      %s76 = sphi 0, %s75
      %s90 = sphi 0, %s76
      %s94 = sphi 0, %s94
      %s96 = sphi 0, %s94
      %s97 = sphi 0, %s96
      %s111 = sphi 0, %s97
      %s115 = sphi 0, %s115
      %s117 = sphi 0, %s115
      %s118 = sphi 0, %s117
      %s132 = sphi 0, %s118
      %s136 = sphi 0, %s136
      %s138 = sphi 0, %s136
      %s139 = sphi 0, %s138
      %s153 = sphi 0, %s139
      %s157 = sphi 0, %s157
      %s159 = sphi 0, %s157
      %s160 = sphi 0, %s159
      %s174 = sphi 0, %s160
      %s180 = sphi 0, %s182
      %s183 = sphi 0, %s180
      %s184 = sphi 0, %s183
      %s200 = sphi 0, %s184
    $region4: #{fastnn_forward.1} parent=1 // loop_header_branch
      %21 = sbr.rel (%p19) target = $region8
    $region5: #{fastnn_forward.1} parent=1 // loop_body
      %s23 = ssub.s32 %s18, 1
      %s24 = ssub.s32 %s18, 2
      %s25 = sadd.s32 %s18, 1
      %s26 = ssub.s32 %s18, %s25
      %p27 = scmp.eq.s32.totalorder %s26, 0
      %s29 = sadd.s32 %s28, 1
      %s30 = scalar_select %p27, %s28, %s29
      %p33 = pneg %p27
      %p34 = scmp.eq.s32.totalorder %s18, 3
      %p35 = por %p33, %p34
      %p36 = scmp.ne.s32.totalorder %s28, %s31
      %p37 = scmp.eq.s32.totalorder %s18, 0
      %p38 = por %p36, %p37
      %p39 = scmp.ne.s32.totalorder %s28, %s31
      %p40 = scmp.eq.s32.totalorder %s23, 3
      %p41 = por %p39, %p40
      %p42 = scmp.ne.s32.totalorder %s31, %s32
      %p43 = scmp.eq.s32.totalorder %s23, 0
      %p44 = por %p42, %p43
      %p45 = scmp.ne.s32.totalorder %s31, %s32
      %p46 = scmp.eq.s32.totalorder %s24, 3
      %p47 = por %p45, %p46
      %p49 = scmp.ne.s32.totalorder %s32, %s48
      %p50 = scmp.eq.s32.totalorder %s24, 0
      %p51 = por %p49, %p50
      %s53 = sadd.s32 %s52, 1
      %p56 = scmp.eq.s32.totalorder %s18, 3
      %p57 = scmp.ne.s32.totalorder %s52, %s54
      %p58 = scmp.eq.s32.totalorder %s18, 0
      %p59 = por %p57, %p58
      %p60 = scmp.ne.s32.totalorder %s52, %s54
      %p61 = scmp.eq.s32.totalorder %s23, 3
      %p62 = por %p60, %p61
      %p63 = scmp.ne.s32.totalorder %s54, %s55
      %p64 = scmp.eq.s32.totalorder %s23, 0
      %p65 = por %p63, %p64
      %p66 = scmp.ne.s32.totalorder %s54, %s55
      %p67 = scmp.eq.s32.totalorder %s24, 3
      %p68 = por %p66, %p67
      %p70 = scmp.ne.s32.totalorder %s55, %s69
      %p71 = scmp.eq.s32.totalorder %s24, 0
      %p72 = por %p70, %p71
      %s74 = sadd.s32 %s73, 1
      %p77 = scmp.eq.s32.totalorder %s18, 3
      %p78 = scmp.ne.s32.totalorder %s73, %s75
      %p79 = scmp.eq.s32.totalorder %s18, 0
      %p80 = por %p78, %p79
      %p81 = scmp.ne.s32.totalorder %s73, %s75
      %p82 = scmp.eq.s32.totalorder %s23, 3
      %p83 = por %p81, %p82
      %p84 = scmp.ne.s32.totalorder %s75, %s76
      %p85 = scmp.eq.s32.totalorder %s23, 0
      %p86 = por %p84, %p85
      %p87 = scmp.ne.s32.totalorder %s75, %s76
      %p88 = scmp.eq.s32.totalorder %s24, 3
      %p89 = por %p87, %p88
      %p91 = scmp.ne.s32.totalorder %s76, %s90
      %p92 = scmp.eq.s32.totalorder %s24, 0
      %p93 = por %p91, %p92
      %s95 = sadd.s32 %s94, 1
      %p98 = scmp.eq.s32.totalorder %s18, 3
      %p99 = scmp.ne.s32.totalorder %s94, %s96
      %p100 = scmp.eq.s32.totalorder %s18, 0
      %p101 = por %p99, %p100
      %p102 = scmp.ne.s32.totalorder %s94, %s96
      %p103 = scmp.eq.s32.totalorder %s23, 3
      %p104 = por %p102, %p103
      %p105 = scmp.ne.s32.totalorder %s96, %s97
      %p106 = scmp.eq.s32.totalorder %s23, 0
      %p107 = por %p105, %p106
      %p108 = scmp.ne.s32.totalorder %s96, %s97
      %p109 = scmp.eq.s32.totalorder %s24, 3
      %p110 = por %p108, %p109
      %p112 = scmp.ne.s32.totalorder %s97, %s111
      %p113 = scmp.eq.s32.totalorder %s24, 0
      %p114 = por %p112, %p113
      %s116 = sadd.s32 %s115, 1
      %p119 = scmp.eq.s32.totalorder %s18, 3
      %p120 = scmp.ne.s32.totalorder %s115, %s117
      %p121 = scmp.eq.s32.totalorder %s18, 0
      %p122 = por %p120, %p121
      %p123 = scmp.ne.s32.totalorder %s115, %s117
      %p124 = scmp.eq.s32.totalorder %s23, 3
      %p125 = por %p123, %p124
      %p126 = scmp.ne.s32.totalorder %s117, %s118
      %p127 = scmp.eq.s32.totalorder %s23, 0
      %p128 = por %p126, %p127
      %p129 = scmp.ne.s32.totalorder %s117, %s118
      %p130 = scmp.eq.s32.totalorder %s24, 3
      %p131 = por %p129, %p130
      %p133 = scmp.ne.s32.totalorder %s118, %s132
      %p134 = scmp.eq.s32.totalorder %s24, 0
      %p135 = por %p133, %p134
      %s137 = sadd.s32 %s136, 1
      %p140 = scmp.eq.s32.totalorder %s18, 3
      %p141 = scmp.ne.s32.totalorder %s136, %s138
      %p142 = scmp.eq.s32.totalorder %s18, 0
      %p143 = por %p141, %p142
      %p144 = scmp.ne.s32.totalorder %s136, %s138
      %p145 = scmp.eq.s32.totalorder %s23, 3
      %p146 = por %p144, %p145
      %p147 = scmp.ne.s32.totalorder %s138, %s139
      %p148 = scmp.eq.s32.totalorder %s23, 0
      %p149 = por %p147, %p148
      %p150 = scmp.ne.s32.totalorder %s138, %s139
      %p151 = scmp.eq.s32.totalorder %s24, 3
      %p152 = por %p150, %p151
      %p154 = scmp.ne.s32.totalorder %s139, %s153
      %p155 = scmp.eq.s32.totalorder %s24, 0
      %p156 = por %p154, %p155
      %s158 = sadd.s32 %s157, 1
      %p161 = scmp.eq.s32.totalorder %s18, 3
      %p162 = scmp.ne.s32.totalorder %s157, %s159
      %p163 = scmp.eq.s32.totalorder %s18, 0
      %p164 = por %p162, %p163
      %p165 = scmp.ne.s32.totalorder %s157, %s159
      %p166 = scmp.eq.s32.totalorder %s23, 3
      %p167 = por %p165, %p166
      %p168 = scmp.ne.s32.totalorder %s159, %s160
      %p169 = scmp.eq.s32.totalorder %s23, 0
      %p170 = por %p168, %p169
      %p171 = scmp.ne.s32.totalorder %s159, %s160
      %p172 = scmp.eq.s32.totalorder %s24, 3
      %p173 = por %p171, %p172
      %p175 = scmp.ne.s32.totalorder %s160, %s174
      %p176 = scmp.eq.s32.totalorder %s24, 0
      %p177 = por %p175, %p176
      %s178 = ssub.s32 %s18, %s25
      %p179 = scmp.eq.s32.totalorder %s178, 0
      %s181 = sadd.s32 %s180, 1
      %s182 = scalar_select %p179, %s180, %s181
      %p185 = pneg %p179
      %p186 = scmp.eq.s32.totalorder %s18, 3
      %p187 = por %p185, %p186
      %p188 = scmp.ne.s32.totalorder %s180, %s183
      %p189 = scmp.eq.s32.totalorder %s18, 0
      %p190 = por %p188, %p189
      %p191 = scmp.ne.s32.totalorder %s180, %s183
      %p192 = scmp.eq.s32.totalorder %s23, 3
      %p193 = por %p191, %p192
      %p194 = scmp.ne.s32.totalorder %s183, %s184
      %p195 = scmp.eq.s32.totalorder %s23, 0
      %p196 = por %p194, %p195
      %p197 = scmp.ne.s32.totalorder %s183, %s184
      %p198 = scmp.eq.s32.totalorder %s24, 3
      %p199 = por %p197, %p198
      %p201 = scmp.ne.s32.totalorder %s184, %s200
      %p202 = scmp.eq.s32.totalorder %s24, 0
      %p203 = por %p201, %p202
      %p204 = scmp.le.s32.totalorder 1, %s18
      %p205 = scmp.lt.s32.totalorder %s18, 5
      %p206 = pnand %p204, %p205
      %p207 = pneg %p206
      // Predicated region
      $region9: #{fastnn_forward.1} parent=5 // pred_check
        _
      $region10: #{fastnn_forward.1} parent=5 // pred_check_branch
        %209 = sbr.rel (%p206) target = $region12
      $region11: #{fastnn_forward.1} parent=5 // pred_region
        %s210 = ssub.s32 %s18, 1
        // Predicated region
        $region13: #{fastnn_forward.1} parent=11 // pred_check
          %p211 = pneg %p65
        $region14: #{fastnn_forward.1} parent=11 // pred_check_branch
          %213 = sbr.rel (%p211) target = $region16
        $region15: #{fastnn_forward.1} parent=11 // pred_region
          _
        $region16: #{fastnn_forward.1} parent=11 // pred_fallthru
          _
        // Predicated region
        $region17: #{fastnn_forward.1} parent=11 // pred_check
          %p214 = pneg %p86
        $region18: #{fastnn_forward.1} parent=11 // pred_check_branch
          %216 = sbr.rel (%p214) target = $region20
        $region19: #{fastnn_forward.1} parent=11 // pred_region
          _
        $region20: #{fastnn_forward.1} parent=11 // pred_fallthru
          _
        // Predicated region
        $region21: #{fastnn_forward.1} parent=11 // pred_check
          %p217 = pneg %p107
        $region22: #{fastnn_forward.1} parent=11 // pred_check_branch
          %219 = sbr.rel (%p217) target = $region24
        $region23: #{fastnn_forward.1} parent=11 // pred_region
          _
        $region24: #{fastnn_forward.1} parent=11 // pred_fallthru
          _
        // Predicated region
        $region25: #{fastnn_forward.1} parent=11 // pred_check
          %p220 = pneg %p128
        $region26: #{fastnn_forward.1} parent=11 // pred_check_branch
          %222 = sbr.rel (%p220) target = $region28
        $region27: #{fastnn_forward.1} parent=11 // pred_region
          _
        $region28: #{fastnn_forward.1} parent=11 // pred_fallthru
          _
        // Predicated region
        $region29: #{fastnn_forward.1} parent=11 // pred_check
          %p223 = pneg %p149
        $region30: #{fastnn_forward.1} parent=11 // pred_check_branch
          %225 = sbr.rel (%p223) target = $region32
        $region31: #{fastnn_forward.1} parent=11 // pred_region
          _
        $region32: #{fastnn_forward.1} parent=11 // pred_fallthru
          _
        // Predicated region
        $region33: #{fastnn_forward.1} parent=11 // pred_check
          %p226 = pneg %p170
        $region34: #{fastnn_forward.1} parent=11 // pred_check_branch
          %228 = sbr.rel (%p226) target = $region36
        $region35: #{fastnn_forward.1} parent=11 // pred_region
          _
        $region36: #{fastnn_forward.1} parent=11 // pred_fallthru
          _
      $region12: #{fastnn_forward.1} parent=5 // pred_fallthru
        _
      %p229 = scmp.lt.s32.totalorder %s18, 4
      // Predicated region
      $region37: #{fastnn_forward.1} parent=5 // pred_check
        %p230 = pneg %p229
      $region38: #{fastnn_forward.1} parent=5 // pred_check_branch
        %232 = sbr.rel (%p230) target = $region40
      $region39: #{fastnn_forward.1} parent=5 // pred_region
        // Predicated region
        $region41: #{fastnn_forward.1} parent=39 // pred_check
          %p233 = pneg %p38
        $region42: #{fastnn_forward.1} parent=39 // pred_check_branch
          %235 = sbr.rel (%p233) target = $region44
        $region43: #{fastnn_forward.1} parent=39 // pred_region
          %s236 = smul.u32 32, %s18
          %s237 = ssub.s32 125, %s236
          %p238 = scmp.lt.s32.totalorder %s237, 32
          %s239 = scalar_select %p238, %s237, 32
          %s240 = smul.u32 128, %s239
          %s241 = smul.u32 %s240, 2
          %p242 = scmp.lt.s32.totalorder %s236, 124
          %s243 = scalar_select %p242, %s236, 124
          %s244 = smul.addr %s243, 2
          %s245 = smul.addr %s244, 8
          %s246 = scalar_lea.vmem %s0, %s245
          %s247 = smul.u32 32, %s18
          %s248 = ssub.s32 125, %s247
          %p249 = scmp.lt.s32.totalorder %s248, 32
          %s250 = scalar_select %p249, %s248, 32
          %s251 = smul.u32 128, %s250
          %s252 = smul.u32 %s251, 2
        $region44: #{fastnn_forward.1} parent=39 // pred_fallthru
          _
      $region40: #{fastnn_forward.1} parent=5 // pred_fallthru
        _
      %p253 = scmp.le.s32.totalorder 1, %s18
      %p254 = scmp.lt.s32.totalorder %s18, 5
      %p255 = pnand %p253, %p254
      %p256 = pneg %p255
      // Predicated region
      $region45: #{fastnn_forward.1} parent=5 // pred_check
        _
      $region46: #{fastnn_forward.1} parent=5 // pred_check_branch
        %258 = sbr.rel (%p255) target = $region48
      $region47: #{fastnn_forward.1} parent=5 // pred_region
        %s259 = ssub.s32 %s18, 1
        %s260 = smul.u32 32, %s23
        %s261 = ssub.s32 125, %s260
        %p262 = scmp.lt.s32.totalorder %s261, 32
        %s263 = scalar_select %p262, %s261, 32
        %s264 = smul.u32 128, %s263
        %s265 = smul.u32 %s264, 2
        %p266 = scmp.lt.s32.totalorder %s260, 124
        %s267 = scalar_select %p266, %s260, 124
        %s268 = smul.addr %s267, 2
        %s269 = smul.addr %s268, 8
        %s270 = scalar_lea.vmem %s0, %s269
        %p271 = pneg %p44
        %p272 = pneg %p41
        %p273 = pneg %p65
        %p274 = pneg %p62
        %p275 = pneg %p86
        %p276 = pneg %p83
        %p277 = pneg %p107
        %p278 = pneg %p104
        %p279 = pneg %p128
        %p280 = pneg %p125
        %p281 = pneg %p149
        %p282 = pneg %p146
        %p283 = pneg %p170
        %p284 = pneg %p167
        %p285 = pneg %p196
        %p286 = pneg %p193
        %s287 = sand.u32 %s183, 1
        %s288 = scalar_lea.sflag [#allocation4], %s287
        %s289 = sand.u32 %s183, 1
        %s290 = smul.addr %s289, 2
        %s291 = scalar_lea.vmem [#allocation3], %s290
        %s292 = smul.u32 32, %s23
        %s293 = ssub.s32 125, %s292
        %p294 = scmp.lt.s32.totalorder %s293, 32
        %s295 = scalar_select %p294, %s293, 32
        %s296 = smul.u32 128, %s295
        %s297 = smul.u32 %s296, 2
        %p298 = scmp.lt.s32.totalorder %s292, 124
        %s299 = scalar_select %p298, %s292, 124
        %s300 = smul.addr %s299, 2
        %s301 = smul.addr %s300, 8
        %s302 = scalar_lea.vmem %s0, %s301
        %s303 = smul.u32 32, %s23
        %s304 = ssub.s32 125, %s303
        %p305 = scmp.lt.s32.totalorder %s304, 32
        %s306 = scalar_select %p305, %s304, 32
        %s307 = smul.u32 128, %s306
        %s308 = smul.u32 %s307, 2
        %v309 = vld [vmem:[%s302] sm:$0xff]
        %v310 = vld [vmem:[%s302 + $0x8] sm:$0xff]
        %v311 = vld [vmem:[%s302 + $0x10] sm:$0xff]
        %v312 = vld [vmem:[%s302 + $0x18] sm:$0xff]
        %v313 = vld [vmem:[%s302 + $0x20] sm:$0xff]
        %v314 = vld [vmem:[%s302 + $0x28] sm:$0xff]
        %v315 = vld [vmem:[%s302 + $0x30] sm:$0xff]
        %v316 = vld [vmem:[%s302 + $0x38] sm:$0xff]
        %v317 = vld [vmem:[%s302 + $0x40] sm:$0xff]
        %v318 = vld [vmem:[%s302 + $0x48] sm:$0xff]
        %v319 = vld [vmem:[%s302 + $0x50] sm:$0xff]
        %v320 = vld [vmem:[%s302 + $0x58] sm:$0xff]
        %v321 = vld [vmem:[%s302 + $0x60] sm:$0xff]
        %v322 = vld [vmem:[%s302 + $0x68] sm:$0xff]
        %v323 = vld [vmem:[%s302 + $0x70] sm:$0xff]
        %v324 = vld [vmem:[%s302 + $0x78] sm:$0xff]
        %v325 = vld [vmem:[%s302 + $0x80] sm:$0xff]
        %v326 = vld [vmem:[%s302 + $0x88] sm:$0xff]
        %v327 = vld [vmem:[%s302 + $0x90] sm:$0xff]
        %v328 = vld [vmem:[%s302 + $0x98] sm:$0xff]
        %v329 = vld [vmem:[%s302 + $0xa0] sm:$0xff]
        %v330 = vld [vmem:[%s302 + $0xa8] sm:$0xff]
        %v331 = vld [vmem:[%s302 + $0xb0] sm:$0xff]
        %v332 = vld [vmem:[%s302 + $0xb8] sm:$0xff]
        %v333 = vld [vmem:[%s302 + $0xc0] sm:$0xff]
        %v334 = vld [vmem:[%s302 + $0xc8] sm:$0xff]
        %v335 = vld [vmem:[%s302 + $0xd0] sm:$0xff]
        %v336 = vld [vmem:[%s302 + $0xd8] sm:$0xff]
        %v337 = vld [vmem:[%s302 + $0xe0] sm:$0xff]
        %v338 = vld [vmem:[%s302 + $0xe8] sm:$0xff]
        %v339 = vld [vmem:[%s302 + $0xf0] sm:$0xff]
        %v340 = vld [vmem:[%s302 + $0xf8] sm:$0xff]
        %v341 = vld [vmem:[%s302 + $0x100] sm:$0xff]
        %v342 = vld [vmem:[%s302 + $0x108] sm:$0xff]
        %v343 = vld [vmem:[%s302 + $0x110] sm:$0xff]
        %v344 = vld [vmem:[%s302 + $0x118] sm:$0xff]
        %v345 = vld [vmem:[%s302 + $0x120] sm:$0xff]
        %v346 = vld [vmem:[%s302 + $0x128] sm:$0xff]
        %v347 = vld [vmem:[%s302 + $0x130] sm:$0xff]
        %v348 = vld [vmem:[%s302 + $0x138] sm:$0xff]
        %v349 = vld [vmem:[%s302 + $0x140] sm:$0xff]
        %v350 = vld [vmem:[%s302 + $0x148] sm:$0xff]
        %v351 = vld [vmem:[%s302 + $0x150] sm:$0xff]
        %v352 = vld [vmem:[%s302 + $0x158] sm:$0xff]
        %v353 = vld [vmem:[%s302 + $0x160] sm:$0xff]
        %v354 = vld [vmem:[%s302 + $0x168] sm:$0xff]
        %v355 = vld [vmem:[%s302 + $0x170] sm:$0xff]
        %v356 = vld [vmem:[%s302 + $0x178] sm:$0xff]
        %v357 = vld [vmem:[%s302 + $0x180] sm:$0xff]
        %v358 = vld [vmem:[%s302 + $0x188] sm:$0xff]
        %v359 = vld [vmem:[%s302 + $0x190] sm:$0xff]
        %v360 = vld [vmem:[%s302 + $0x198] sm:$0xff]
        %v361 = vld [vmem:[%s302 + $0x1a0] sm:$0xff]
        %v362 = vld [vmem:[%s302 + $0x1a8] sm:$0xff]
        %v363 = vld [vmem:[%s302 + $0x1b0] sm:$0xff]
        %v364 = vld [vmem:[%s302 + $0x1b8] sm:$0xff]
        %v365 = vld [vmem:[%s302 + $0x1c0] sm:$0xff]
        %v366 = vld [vmem:[%s302 + $0x1c8] sm:$0xff]
        %v367 = vld [vmem:[%s302 + $0x1d0] sm:$0xff]
        %v368 = vld [vmem:[%s302 + $0x1d8] sm:$0xff]
        %v369 = vld [vmem:[%s302 + $0x1e0] sm:$0xff]
        %v370 = vld [vmem:[%s302 + $0x1e8] sm:$0xff]
        %v371 = vld [vmem:[%s302 + $0x1f0] sm:$0xff]
        %v372 = vld [vmem:[%s302 + $0x1f8] sm:$0xff]
        %v373 = vld [vmem:[%s1] sm:$0xff]
        %v374 = vld [vmem:[%s1 + $0x8] sm:$0xff]
        %v375 = vld [vmem:[%s1 + $0x10] sm:$0xff]
        %v376 = vld [vmem:[%s1 + $0x18] sm:$0xff]
        %v377 = vld [vmem:[%s1 + $0x20] sm:$0xff]
        %v378 = vld [vmem:[%s1 + $0x28] sm:$0xff]
        %v379 = vld [vmem:[%s1 + $0x30] sm:$0xff]
        %v380 = vld [vmem:[%s1 + $0x38] sm:$0xff]
        %v381 = vld [vmem:[%s1 + $0x40] sm:$0xff]
        %v382 = vld [vmem:[%s1 + $0x48] sm:$0xff]
        %v383 = vld [vmem:[%s1 + $0x50] sm:$0xff]
        %v384 = vld [vmem:[%s1 + $0x58] sm:$0xff]
        %v385 = vld [vmem:[%s1 + $0x60] sm:$0xff]
        %v386 = vld [vmem:[%s1 + $0x68] sm:$0xff]
        %v387 = vld [vmem:[%s1 + $0x70] sm:$0xff]
        %v388 = vld [vmem:[%s1 + $0x78] sm:$0xff]
        %v389 = vld [vmem:[%s1 + $0x80] sm:$0xff]
        %v390 = vld [vmem:[%s1 + $0x88] sm:$0xff]
        %v391 = vld [vmem:[%s1 + $0x90] sm:$0xff]
        %v392 = vld [vmem:[%s1 + $0x98] sm:$0xf]
        %v393 = vld [vmem:[%s2] sm:$0x1]
        %v395 = vlaneseq
        %v396 = vshrl.u32 %v395, 7
        %v397 = vsub.s32 0, %v396
        %v398 = vrot.slane %v393, %v397
        %vm400 = vcmask 228352
        %v402 = vsel %vm400, %v310, 0
        %v405 = vsel %vm400, %v312, 0
        %v408 = vsel %vm400, %v314, 0
        %v411 = vsel %vm400, %v316, 0
        %v414 = vsel %vm400, %v318, 0
        %v417 = vsel %vm400, %v320, 0
        %v420 = vsel %vm400, %v322, 0
        %v423 = vsel %vm400, %v324, 0
        %v426 = vsel %vm400, %v326, 0
        %v429 = vsel %vm400, %v328, 0
        %v432 = vsel %vm400, %v330, 0
        %v435 = vsel %vm400, %v332, 0
        %v438 = vsel %vm400, %v334, 0
        %v441 = vsel %vm400, %v336, 0
        %v444 = vsel %vm400, %v338, 0
        %v447 = vsel %vm400, %v340, 0
        %v450 = vsel %vm400, %v342, 0
        %v453 = vsel %vm400, %v344, 0
        %v456 = vsel %vm400, %v346, 0
        %v459 = vsel %vm400, %v348, 0
        %v462 = vsel %vm400, %v350, 0
        %v465 = vsel %vm400, %v352, 0
        %v468 = vsel %vm400, %v354, 0
        %v471 = vsel %vm400, %v356, 0
        %v474 = vsel %vm400, %v358, 0
        %v477 = vsel %vm400, %v360, 0
        %v480 = vsel %vm400, %v362, 0
        %v483 = vsel %vm400, %v364, 0
        %v486 = vsel %vm400, %v366, 0
        %v489 = vsel %vm400, %v368, 0
        %v492 = vsel %vm400, %v370, 0
        %v495 = vsel %vm400, %v372, 0
        %vm497 = vcmask 1043456
        %v499 = vsel %vm497, %v392, 0
        %501 = vmatprep.subr.mxu0 0.0
        %502 = vmatpush1.msra.mxu0 %v388
        %503 = vmatprep.subr.mxu0 0.0
        %504 = vmatpush1.msra.mxu0 %v387
        %505 = vmatprep.subr.mxu0 0.0
        %506 = vmatpush1.msra.mxu0 %v386
        %507 = vmatprep.subr.mxu0 0.0
        %508 = vmatpush1.msra.mxu0 %v385
        %509 = vmatprep.subr.mxu0 0.0
        %510 = vmatpush1.msra.mxu0 %v384
        %511 = vmatprep.subr.mxu0 0.0
        %512 = vmatpush1.msra.mxu0 %v383
        %513 = vmatprep.subr.mxu0 0.0
        %514 = vmatpush1.msra.mxu0 %v382
        %515 = vmatprep.subr.mxu0 0.0
        %516 = vmatpush1.msra.mxu0 %v381
        %517 = vmatprep.subr.mxu0 0.0
        %518 = vmatpush1.msra.mxu0 %v380
        %519 = vmatprep.subr.mxu0 0.0
        %520 = vmatpush1.msra.mxu0 %v379
        %521 = vmatprep.subr.mxu0 0.0
        %522 = vmatpush1.msra.mxu0 %v378
        %523 = vmatprep.subr.mxu0 0.0
        %524 = vmatpush1.msra.mxu0 %v377
        %525 = vmatprep.subr.mxu0 0.0
        %526 = vmatpush1.msra.mxu0 %v376
        %527 = vmatprep.subr.mxu0 0.0
        %528 = vmatpush1.msra.mxu0 %v375
        %529 = vmatprep.subr.mxu0 0.0
        %530 = vmatpush1.msra.mxu0 %v374
        %531 = vmatprep.subr.mxu0 0.0
        %532 = vmatpush1.msra.mxu0 %v373
        %533 = vmatprep.subr.mxu0 0.0
        %534 = vmatpush2.msra.mxu0 0.0
        %535 = vmatprep.subr.mxu0 0.0
        %536 = vmatpush2.msra.mxu0 0.0
        %537 = vmatprep.subr.mxu0 0.0
        %538 = vmatpush2.msra.mxu0 0.0
        %539 = vmatprep.subr.mxu0 0.0
        %540 = vmatpush2.msra.mxu0 0.0
        %541 = vmatprep.subr.mxu0 0.0
        %542 = vmatpush2.msra.mxu0 0.0
        %543 = vmatprep.subr.mxu0 0.0
        %544 = vmatpush2.msra.mxu0 0.0
        %545 = vmatprep.subr.mxu0 0.0
        %546 = vmatpush2.msra.mxu0 0.0
        %547 = vmatprep.subr.mxu0 0.0
        %548 = vmatpush2.msra.mxu0 0.0
        %549 = vmatprep.subr.mxu0 0.0
        %550 = vmatpush2.msra.mxu0 0.0
        %551 = vmatprep.subr.mxu0 0.0
        %552 = vmatpush2.msra.mxu0 0.0
        %553 = vmatprep.subr.mxu0 0.0
        %554 = vmatpush2.msra.mxu0 0.0
        %555 = vmatprep.subr.mxu0 0.0
        %556 = vmatpush2.msra.mxu0 0.0
        %557 = vmatprep.subr.mxu0 0.0
        %558 = vmatpush2.msra.mxu0 %v499
        %559 = vmatprep.subr.mxu0 0.0
        %560 = vmatpush2.msra.mxu0 %v391
        %561 = vmatprep.subr.mxu0 0.0
        %562 = vmatpush2.msra.mxu0 %v390
        %563 = vmatprep.subr.mxu0 0.0
        %564 = vmatpush2.msra.mxu0 %v389
        %565 = vmatprep.mubr.f32.mxu0 %v402
        %566 = vmatmul.mubr.f32.gmra.mxu0 %v309
        %v567 = vpop.f32.mrf.mxu0
        %v568 = vadd.f32 %v398, %v567
        %v569 = vpop.f32.mrf.mxu0
        %570 = vmatprep.mubr.f32.mxu0 %v405
        %571 = vmatmul.mubr.f32.gmra.mxu0 %v311
        %v572 = vpop.f32.mrf.mxu0
        %v573 = vadd.f32 %v398, %v572
        %v574 = vpop.f32.mrf.mxu0
        %575 = vmatprep.mubr.f32.mxu0 %v408
        %576 = vmatmul.mubr.f32.gmra.mxu0 %v313
        %v577 = vpop.f32.mrf.mxu0
        %v578 = vadd.f32 %v398, %v577
        %v579 = vpop.f32.mrf.mxu0
        %580 = vmatprep.mubr.f32.mxu0 %v411
        %581 = vmatmul.mubr.f32.gmra.mxu0 %v315
        %v582 = vpop.f32.mrf.mxu0
        %v583 = vadd.f32 %v398, %v582
        %v584 = vpop.f32.mrf.mxu0
        %585 = vmatprep.mubr.f32.mxu0 %v414
        %586 = vmatmul.mubr.f32.gmra.mxu0 %v317
        %v587 = vpop.f32.mrf.mxu0
        %v588 = vadd.f32 %v398, %v587
        %v589 = vpop.f32.mrf.mxu0
        %590 = vmatprep.mubr.f32.mxu0 %v417
        %591 = vmatmul.mubr.f32.gmra.mxu0 %v319
        %v592 = vpop.f32.mrf.mxu0
        %v593 = vadd.f32 %v398, %v592
        %v594 = vpop.f32.mrf.mxu0
        %595 = vmatprep.mubr.f32.mxu0 %v420
        %596 = vmatmul.mubr.f32.gmra.mxu0 %v321
        %v597 = vpop.f32.mrf.mxu0
        %v598 = vadd.f32 %v398, %v597
        %v599 = vpop.f32.mrf.mxu0
        %600 = vmatprep.mubr.f32.mxu0 %v423
        %601 = vmatmul.mubr.f32.gmra.mxu0 %v323
        %v602 = vpop.f32.mrf.mxu0
        %v603 = vadd.f32 %v398, %v602
        %v604 = vpop.f32.mrf.mxu0
        %605 = vmatprep.mubr.f32.mxu0 %v426
        %606 = vmatmul.mubr.f32.gmra.mxu0 %v325
        %v607 = vpop.f32.mrf.mxu0
        %v608 = vadd.f32 %v398, %v607
        %v609 = vpop.f32.mrf.mxu0
        %610 = vmatprep.mubr.f32.mxu0 %v429
        %611 = vmatmul.mubr.f32.gmra.mxu0 %v327
        %v612 = vpop.f32.mrf.mxu0
        %v613 = vadd.f32 %v398, %v612
        %v614 = vpop.f32.mrf.mxu0
        %615 = vmatprep.mubr.f32.mxu0 %v432
        %616 = vmatmul.mubr.f32.gmra.mxu0 %v329
        %v617 = vpop.f32.mrf.mxu0
        %v618 = vadd.f32 %v398, %v617
        %v619 = vpop.f32.mrf.mxu0
        %620 = vmatprep.mubr.f32.mxu0 %v435
        %621 = vmatmul.mubr.f32.gmra.mxu0 %v331
        %v622 = vpop.f32.mrf.mxu0
        %v623 = vadd.f32 %v398, %v622
        %v624 = vpop.f32.mrf.mxu0
        %625 = vmatprep.mubr.f32.mxu0 %v438
        %626 = vmatmul.mubr.f32.gmra.mxu0 %v333
        %v627 = vpop.f32.mrf.mxu0
        %v628 = vadd.f32 %v398, %v627
        %v629 = vpop.f32.mrf.mxu0
        %630 = vmatprep.mubr.f32.mxu0 %v441
        %631 = vmatmul.mubr.f32.gmra.mxu0 %v335
        %v632 = vpop.f32.mrf.mxu0
        %v633 = vadd.f32 %v398, %v632
        %v634 = vpop.f32.mrf.mxu0
        %635 = vmatprep.mubr.f32.mxu0 %v444
        %636 = vmatmul.mubr.f32.gmra.mxu0 %v337
        %v637 = vpop.f32.mrf.mxu0
        %v638 = vadd.f32 %v398, %v637
        %v639 = vpop.f32.mrf.mxu0
        %640 = vmatprep.mubr.f32.mxu0 %v447
        %641 = vmatmul.mubr.f32.gmra.mxu0 %v339
        %v642 = vpop.f32.mrf.mxu0
        %v643 = vadd.f32 %v398, %v642
        %v644 = vpop.f32.mrf.mxu0
        %645 = vmatprep.mubr.f32.mxu0 %v450
        %646 = vmatmul.mubr.f32.gmra.mxu0 %v341
        %v647 = vpop.f32.mrf.mxu0
        %v648 = vadd.f32 %v398, %v647
        %v649 = vpop.f32.mrf.mxu0
        %650 = vmatprep.mubr.f32.mxu0 %v453
        %651 = vmatmul.mubr.f32.gmra.mxu0 %v343
        %v652 = vpop.f32.mrf.mxu0
        %v653 = vadd.f32 %v398, %v652
        %v654 = vpop.f32.mrf.mxu0
        %655 = vmatprep.mubr.f32.mxu0 %v456
        %656 = vmatmul.mubr.f32.gmra.mxu0 %v345
        %v657 = vpop.f32.mrf.mxu0
        %v658 = vadd.f32 %v398, %v657
        %v659 = vpop.f32.mrf.mxu0
        %660 = vmatprep.mubr.f32.mxu0 %v459
        %661 = vmatmul.mubr.f32.gmra.mxu0 %v347
        %v662 = vpop.f32.mrf.mxu0
        %v663 = vadd.f32 %v398, %v662
        %v664 = vpop.f32.mrf.mxu0
        %665 = vmatprep.mubr.f32.mxu0 %v462
        %666 = vmatmul.mubr.f32.gmra.mxu0 %v349
        %v667 = vpop.f32.mrf.mxu0
        %v668 = vadd.f32 %v398, %v667
        %v669 = vpop.f32.mrf.mxu0
        %670 = vmatprep.mubr.f32.mxu0 %v465
        %671 = vmatmul.mubr.f32.gmra.mxu0 %v351
        %v672 = vpop.f32.mrf.mxu0
        %v673 = vadd.f32 %v398, %v672
        %v674 = vpop.f32.mrf.mxu0
        %675 = vmatprep.mubr.f32.mxu0 %v468
        %676 = vmatmul.mubr.f32.gmra.mxu0 %v353
        %v677 = vpop.f32.mrf.mxu0
        %v678 = vadd.f32 %v398, %v677
        %v679 = vpop.f32.mrf.mxu0
        %680 = vmatprep.mubr.f32.mxu0 %v471
        %681 = vmatmul.mubr.f32.gmra.mxu0 %v355
        %v682 = vpop.f32.mrf.mxu0
        %v683 = vadd.f32 %v398, %v682
        %v684 = vpop.f32.mrf.mxu0
        %685 = vmatprep.mubr.f32.mxu0 %v474
        %686 = vmatmul.mubr.f32.gmra.mxu0 %v357
        %v687 = vpop.f32.mrf.mxu0
        %v688 = vadd.f32 %v398, %v687
        %v689 = vpop.f32.mrf.mxu0
        %690 = vmatprep.mubr.f32.mxu0 %v477
        %691 = vmatmul.mubr.f32.gmra.mxu0 %v359
        %v692 = vpop.f32.mrf.mxu0
        %v693 = vadd.f32 %v398, %v692
        %v694 = vpop.f32.mrf.mxu0
        %695 = vmatprep.mubr.f32.mxu0 %v480
        %696 = vmatmul.mubr.f32.gmra.mxu0 %v361
        %v697 = vpop.f32.mrf.mxu0
        %v698 = vadd.f32 %v398, %v697
        %v699 = vpop.f32.mrf.mxu0
        %700 = vmatprep.mubr.f32.mxu0 %v483
        %701 = vmatmul.mubr.f32.gmra.mxu0 %v363
        %v702 = vpop.f32.mrf.mxu0
        %v703 = vadd.f32 %v398, %v702
        %v704 = vpop.f32.mrf.mxu0
        %705 = vmatprep.mubr.f32.mxu0 %v486
        %706 = vmatmul.mubr.f32.gmra.mxu0 %v365
        %v707 = vpop.f32.mrf.mxu0
        %v708 = vadd.f32 %v398, %v707
        %v709 = vpop.f32.mrf.mxu0
        %710 = vmatprep.mubr.f32.mxu0 %v489
        %711 = vmatmul.mubr.f32.gmra.mxu0 %v367
        %v712 = vpop.f32.mrf.mxu0
        %v713 = vadd.f32 %v398, %v712
        %v714 = vpop.f32.mrf.mxu0
        %715 = vmatprep.mubr.f32.mxu0 %v492
        %716 = vmatmul.mubr.f32.gmra.mxu0 %v369
        %v717 = vpop.f32.mrf.mxu0
        %v718 = vadd.f32 %v398, %v717
        %v719 = vpop.f32.mrf.mxu0
        %720 = vmatprep.mubr.f32.mxu0 %v495
        %721 = vmatmul.mubr.f32.gmra.mxu0 %v371
        %v722 = vpop.f32.mrf.mxu0
        %v723 = vadd.f32 %v398, %v722
        %v724 = vpop.f32.mrf.mxu0
        %725 = vdwg.mxu0
        %v726 = vmax.f32 %v568, 0.0
        %v727 = vmax.f32 %v573, 0.0
        %v728 = vmax.f32 %v578, 0.0
        %v729 = vmax.f32 %v583, 0.0
        %v730 = vmax.f32 %v588, 0.0
        %v731 = vmax.f32 %v593, 0.0
        %v732 = vmax.f32 %v598, 0.0
        %v733 = vmax.f32 %v603, 0.0
        %v734 = vmax.f32 %v608, 0.0
        %v735 = vmax.f32 %v613, 0.0
        %v736 = vmax.f32 %v618, 0.0
        %v737 = vmax.f32 %v623, 0.0
        %v738 = vmax.f32 %v628, 0.0
        %v739 = vmax.f32 %v633, 0.0
        %v740 = vmax.f32 %v638, 0.0
        %v741 = vmax.f32 %v643, 0.0
        %v742 = vmax.f32 %v648, 0.0
        %v743 = vmax.f32 %v653, 0.0
        %v744 = vmax.f32 %v658, 0.0
        %v745 = vmax.f32 %v663, 0.0
        %v746 = vmax.f32 %v668, 0.0
        %v747 = vmax.f32 %v673, 0.0
        %v748 = vmax.f32 %v678, 0.0
        %v749 = vmax.f32 %v683, 0.0
        %v750 = vmax.f32 %v688, 0.0
        %v751 = vmax.f32 %v693, 0.0
        %v752 = vmax.f32 %v698, 0.0
        %v753 = vmax.f32 %v703, 0.0
        %v754 = vmax.f32 %v708, 0.0
        %v755 = vmax.f32 %v713, 0.0
        %v756 = vmax.f32 %v718, 0.0
        %v757 = vmax.f32 %v723, 0.0
        %v758 = vld [vmem:[%s3] sm:$0xff]
        %v759 = vld [vmem:[%s3 + $0x8] sm:$0xff]
        %v760 = vld [vmem:[%s3 + $0x10] sm:$0xff]
        %v761 = vld [vmem:[%s3 + $0x18] sm:$0xff]
        %v762 = vld [vmem:[%s3 + $0x20] sm:$0xff]
        %v763 = vld [vmem:[%s3 + $0x28] sm:$0xff]
        %v764 = vld [vmem:[%s3 + $0x30] sm:$0xff]
        %v765 = vld [vmem:[%s3 + $0x38] sm:$0xff]
        %v766 = vld [vmem:[%s4] sm:$0x1]
        %v768 = vlaneseq
        %v769 = vshrl.u32 %v768, 7
        %v770 = vsub.s32 0, %v769
        %v771 = vrot.slane %v766, %v770
        %vm773 = vcmask 523264
        %v775 = vsel %vm773, %v726, 0
        %v778 = vsel %vm773, %v727, 0
        %v781 = vsel %vm773, %v728, 0
        %v784 = vsel %vm773, %v729, 0
        %v787 = vsel %vm773, %v730, 0
        %v790 = vsel %vm773, %v731, 0
        %v793 = vsel %vm773, %v732, 0
        %v796 = vsel %vm773, %v733, 0
        %v799 = vsel %vm773, %v734, 0
        %v802 = vsel %vm773, %v735, 0
        %v805 = vsel %vm773, %v736, 0
        %v808 = vsel %vm773, %v737, 0
        %v811 = vsel %vm773, %v738, 0
        %v814 = vsel %vm773, %v739, 0
        %v817 = vsel %vm773, %v740, 0
        %v820 = vsel %vm773, %v741, 0
        %v823 = vsel %vm773, %v742, 0
        %v826 = vsel %vm773, %v743, 0
        %v829 = vsel %vm773, %v744, 0
        %v832 = vsel %vm773, %v745, 0
        %v835 = vsel %vm773, %v746, 0
        %v838 = vsel %vm773, %v747, 0
        %v841 = vsel %vm773, %v748, 0
        %v844 = vsel %vm773, %v749, 0
        %v847 = vsel %vm773, %v750, 0
        %v850 = vsel %vm773, %v751, 0
        %v853 = vsel %vm773, %v752, 0
        %v856 = vsel %vm773, %v753, 0
        %v859 = vsel %vm773, %v754, 0
        %v862 = vsel %vm773, %v755, 0
        %v865 = vsel %vm773, %v756, 0
        %v868 = vsel %vm773, %v757, 0
        %870 = vmatprep.subr.mxu0 0.0
        %871 = vmatpush1.msra.mxu0 0.0
        %872 = vmatprep.subr.mxu0 0.0
        %873 = vmatpush1.msra.mxu0 0.0
        %874 = vmatprep.subr.mxu0 0.0
        %875 = vmatpush1.msra.mxu0 0.0
        %876 = vmatprep.subr.mxu0 0.0
        %877 = vmatpush1.msra.mxu0 0.0
        %878 = vmatprep.subr.mxu0 0.0
        %879 = vmatpush1.msra.mxu0 0.0
        %880 = vmatprep.subr.mxu0 0.0
        %881 = vmatpush1.msra.mxu0 0.0
        %882 = vmatprep.subr.mxu0 0.0
        %883 = vmatpush1.msra.mxu0 0.0
        %884 = vmatprep.subr.mxu0 0.0
        %885 = vmatpush1.msra.mxu0 0.0
        %886 = vmatprep.subr.mxu0 0.0
        %887 = vmatpush1.msra.mxu0 %v765
        %888 = vmatprep.subr.mxu0 0.0
        %889 = vmatpush1.msra.mxu0 %v764
        %890 = vmatprep.subr.mxu0 0.0
        %891 = vmatpush1.msra.mxu0 %v763
        %892 = vmatprep.subr.mxu0 0.0
        %893 = vmatpush1.msra.mxu0 %v762
        %894 = vmatprep.subr.mxu0 0.0
        %895 = vmatpush1.msra.mxu0 %v761
        %896 = vmatprep.subr.mxu0 0.0
        %897 = vmatpush1.msra.mxu0 %v760
        %898 = vmatprep.subr.mxu0 0.0
        %899 = vmatpush1.msra.mxu0 %v759
        %900 = vmatprep.subr.mxu0 0.0
        %901 = vmatpush1.msra.mxu0 %v758
        %902 = vmatprep.subr.mxu0 0.0
        %903 = vmatpush2.msra.mxu0 0.0
        %904 = vmatprep.subr.mxu0 0.0
        %905 = vmatpush2.msra.mxu0 0.0
        %906 = vmatprep.subr.mxu0 0.0
        %907 = vmatpush2.msra.mxu0 0.0
        %908 = vmatprep.subr.mxu0 0.0
        %909 = vmatpush2.msra.mxu0 0.0
        %910 = vmatprep.subr.mxu0 0.0
        %911 = vmatpush2.msra.mxu0 0.0
        %912 = vmatprep.subr.mxu0 0.0
        %913 = vmatpush2.msra.mxu0 0.0
        %914 = vmatprep.subr.mxu0 0.0
        %915 = vmatpush2.msra.mxu0 0.0
        %916 = vmatprep.subr.mxu0 0.0
        %917 = vmatpush2.msra.mxu0 0.0
        %918 = vmatprep.subr.mxu0 0.0
        %919 = vmatpush2.msra.mxu0 0.0
        %920 = vmatprep.subr.mxu0 0.0
        %921 = vmatpush2.msra.mxu0 0.0
        %922 = vmatprep.subr.mxu0 0.0
        %923 = vmatpush2.msra.mxu0 0.0
        %924 = vmatprep.subr.mxu0 0.0
        %925 = vmatpush2.msra.mxu0 0.0
        %926 = vmatprep.subr.mxu0 0.0
        %927 = vmatpush2.msra.mxu0 0.0
        %928 = vmatprep.subr.mxu0 0.0
        %929 = vmatpush2.msra.mxu0 0.0
        %930 = vmatprep.subr.mxu0 0.0
        %931 = vmatpush2.msra.mxu0 0.0
        %932 = vmatprep.subr.mxu0 0.0
        %933 = vmatpush2.msra.mxu0 0.0
        %934 = vmatprep.mubr.f32.mxu0 0.0
        %935 = vmatmul.mubr.f32.gmra.mxu0 %v775
        %v936 = vpop.f32.mrf.mxu0
        %v937 = vadd.f32 %v771, %v936
        %v938 = vpop.f32.mrf.mxu0
        %939 = vmatprep.mubr.f32.mxu0 0.0
        %940 = vmatmul.mubr.f32.gmra.mxu0 %v778
        %v941 = vpop.f32.mrf.mxu0
        %v942 = vadd.f32 %v771, %v941
        %v943 = vpop.f32.mrf.mxu0
        %944 = vmatprep.mubr.f32.mxu0 0.0
        %945 = vmatmul.mubr.f32.gmra.mxu0 %v781
        %v946 = vpop.f32.mrf.mxu0
        %v947 = vadd.f32 %v771, %v946
        %v948 = vpop.f32.mrf.mxu0
        %949 = vmatprep.mubr.f32.mxu0 0.0
        %950 = vmatmul.mubr.f32.gmra.mxu0 %v784
        %v951 = vpop.f32.mrf.mxu0
        %v952 = vadd.f32 %v771, %v951
        %v953 = vpop.f32.mrf.mxu0
        %954 = vmatprep.mubr.f32.mxu0 0.0
        %955 = vmatmul.mubr.f32.gmra.mxu0 %v787
        %v956 = vpop.f32.mrf.mxu0
        %v957 = vadd.f32 %v771, %v956
        %v958 = vpop.f32.mrf.mxu0
        %959 = vmatprep.mubr.f32.mxu0 0.0
        %960 = vmatmul.mubr.f32.gmra.mxu0 %v790
        %v961 = vpop.f32.mrf.mxu0
        %v962 = vadd.f32 %v771, %v961
        %v963 = vpop.f32.mrf.mxu0
        %964 = vmatprep.mubr.f32.mxu0 0.0
        %965 = vmatmul.mubr.f32.gmra.mxu0 %v793
        %v966 = vpop.f32.mrf.mxu0
        %v967 = vadd.f32 %v771, %v966
        %v968 = vpop.f32.mrf.mxu0
        %969 = vmatprep.mubr.f32.mxu0 0.0
        %970 = vmatmul.mubr.f32.gmra.mxu0 %v796
        %v971 = vpop.f32.mrf.mxu0
        %v972 = vadd.f32 %v771, %v971
        %v973 = vpop.f32.mrf.mxu0
        %974 = vmatprep.mubr.f32.mxu0 0.0
        %975 = vmatmul.mubr.f32.gmra.mxu0 %v799
        %v976 = vpop.f32.mrf.mxu0
        %v977 = vadd.f32 %v771, %v976
        %v978 = vpop.f32.mrf.mxu0
        %979 = vmatprep.mubr.f32.mxu0 0.0
        %980 = vmatmul.mubr.f32.gmra.mxu0 %v802
        %v981 = vpop.f32.mrf.mxu0
        %v982 = vadd.f32 %v771, %v981
        %v983 = vpop.f32.mrf.mxu0
        %984 = vmatprep.mubr.f32.mxu0 0.0
        %985 = vmatmul.mubr.f32.gmra.mxu0 %v805
        %v986 = vpop.f32.mrf.mxu0
        %v987 = vadd.f32 %v771, %v986
        %v988 = vpop.f32.mrf.mxu0
        %989 = vmatprep.mubr.f32.mxu0 0.0
        %990 = vmatmul.mubr.f32.gmra.mxu0 %v808
        %v991 = vpop.f32.mrf.mxu0
        %v992 = vadd.f32 %v771, %v991
        %v993 = vpop.f32.mrf.mxu0
        %994 = vmatprep.mubr.f32.mxu0 0.0
        %995 = vmatmul.mubr.f32.gmra.mxu0 %v811
        %v996 = vpop.f32.mrf.mxu0
        %v997 = vadd.f32 %v771, %v996
        %v998 = vpop.f32.mrf.mxu0
        %999 = vmatprep.mubr.f32.mxu0 0.0
        %1000 = vmatmul.mubr.f32.gmra.mxu0 %v814
        %v1001 = vpop.f32.mrf.mxu0
        %v1002 = vadd.f32 %v771, %v1001
        %v1003 = vpop.f32.mrf.mxu0
        %1004 = vmatprep.mubr.f32.mxu0 0.0
        %1005 = vmatmul.mubr.f32.gmra.mxu0 %v817
        %v1006 = vpop.f32.mrf.mxu0
        %v1007 = vadd.f32 %v771, %v1006
        %v1008 = vpop.f32.mrf.mxu0
        %1009 = vmatprep.mubr.f32.mxu0 0.0
        %1010 = vmatmul.mubr.f32.gmra.mxu0 %v820
        %v1011 = vpop.f32.mrf.mxu0
        %v1012 = vadd.f32 %v771, %v1011
        %v1013 = vpop.f32.mrf.mxu0
        %1014 = vmatprep.mubr.f32.mxu0 0.0
        %1015 = vmatmul.mubr.f32.gmra.mxu0 %v823
        %v1016 = vpop.f32.mrf.mxu0
        %v1017 = vadd.f32 %v771, %v1016
        %v1018 = vpop.f32.mrf.mxu0
        %1019 = vmatprep.mubr.f32.mxu0 0.0
        %1020 = vmatmul.mubr.f32.gmra.mxu0 %v826
        %v1021 = vpop.f32.mrf.mxu0
        %v1022 = vadd.f32 %v771, %v1021
        %v1023 = vpop.f32.mrf.mxu0
        %1024 = vmatprep.mubr.f32.mxu0 0.0
        %1025 = vmatmul.mubr.f32.gmra.mxu0 %v829
        %v1026 = vpop.f32.mrf.mxu0
        %v1027 = vadd.f32 %v771, %v1026
        %v1028 = vpop.f32.mrf.mxu0
        %1029 = vmatprep.mubr.f32.mxu0 0.0
        %1030 = vmatmul.mubr.f32.gmra.mxu0 %v832
        %v1031 = vpop.f32.mrf.mxu0
        %v1032 = vadd.f32 %v771, %v1031
        %v1033 = vpop.f32.mrf.mxu0
        %1034 = vmatprep.mubr.f32.mxu0 0.0
        %1035 = vmatmul.mubr.f32.gmra.mxu0 %v835
        %v1036 = vpop.f32.mrf.mxu0
        %v1037 = vadd.f32 %v771, %v1036
        %v1038 = vpop.f32.mrf.mxu0
        %1039 = vmatprep.mubr.f32.mxu0 0.0
        %1040 = vmatmul.mubr.f32.gmra.mxu0 %v838
        %v1041 = vpop.f32.mrf.mxu0
        %v1042 = vadd.f32 %v771, %v1041
        %v1043 = vpop.f32.mrf.mxu0
        %1044 = vmatprep.mubr.f32.mxu0 0.0
        %1045 = vmatmul.mubr.f32.gmra.mxu0 %v841
        %v1046 = vpop.f32.mrf.mxu0
        %v1047 = vadd.f32 %v771, %v1046
        %v1048 = vpop.f32.mrf.mxu0
        %1049 = vmatprep.mubr.f32.mxu0 0.0
        %1050 = vmatmul.mubr.f32.gmra.mxu0 %v844
        %v1051 = vpop.f32.mrf.mxu0
        %v1052 = vadd.f32 %v771, %v1051
        %v1053 = vpop.f32.mrf.mxu0
        %1054 = vmatprep.mubr.f32.mxu0 0.0
        %1055 = vmatmul.mubr.f32.gmra.mxu0 %v847
        %v1056 = vpop.f32.mrf.mxu0
        %v1057 = vadd.f32 %v771, %v1056
        %v1058 = vpop.f32.mrf.mxu0
        %1059 = vmatprep.mubr.f32.mxu0 0.0
        %1060 = vmatmul.mubr.f32.gmra.mxu0 %v850
        %v1061 = vpop.f32.mrf.mxu0
        %v1062 = vadd.f32 %v771, %v1061
        %v1063 = vpop.f32.mrf.mxu0
        %1064 = vmatprep.mubr.f32.mxu0 0.0
        %1065 = vmatmul.mubr.f32.gmra.mxu0 %v853
        %v1066 = vpop.f32.mrf.mxu0
        %v1067 = vadd.f32 %v771, %v1066
        %v1068 = vpop.f32.mrf.mxu0
        %1069 = vmatprep.mubr.f32.mxu0 0.0
        %1070 = vmatmul.mubr.f32.gmra.mxu0 %v856
        %v1071 = vpop.f32.mrf.mxu0
        %v1072 = vadd.f32 %v771, %v1071
        %v1073 = vpop.f32.mrf.mxu0
        %1074 = vmatprep.mubr.f32.mxu0 0.0
        %1075 = vmatmul.mubr.f32.gmra.mxu0 %v859
        %v1076 = vpop.f32.mrf.mxu0
        %v1077 = vadd.f32 %v771, %v1076
        %v1078 = vpop.f32.mrf.mxu0
        %1079 = vmatprep.mubr.f32.mxu0 0.0
        %1080 = vmatmul.mubr.f32.gmra.mxu0 %v862
        %v1081 = vpop.f32.mrf.mxu0
        %v1082 = vadd.f32 %v771, %v1081
        %v1083 = vpop.f32.mrf.mxu0
        %1084 = vmatprep.mubr.f32.mxu0 0.0
        %1085 = vmatmul.mubr.f32.gmra.mxu0 %v865
        %v1086 = vpop.f32.mrf.mxu0
        %v1087 = vadd.f32 %v771, %v1086
        %v1088 = vpop.f32.mrf.mxu0
        %1089 = vmatprep.mubr.f32.mxu0 0.0
        %1090 = vmatmul.mubr.f32.gmra.mxu0 %v868
        %v1091 = vpop.f32.mrf.mxu0
        %v1092 = vadd.f32 %v771, %v1091
        %v1093 = vpop.f32.mrf.mxu0
        %1094 = vdwg.mxu0
        %v1095 = vmax.f32 %v937, 0.0
        %v1096 = vmax.f32 %v942, 0.0
        %v1097 = vmax.f32 %v947, 0.0
        %v1098 = vmax.f32 %v952, 0.0
        %v1099 = vmax.f32 %v957, 0.0
        %v1100 = vmax.f32 %v962, 0.0
        %v1101 = vmax.f32 %v967, 0.0
        %v1102 = vmax.f32 %v972, 0.0
        %v1103 = vmax.f32 %v977, 0.0
        %v1104 = vmax.f32 %v982, 0.0
        %v1105 = vmax.f32 %v987, 0.0
        %v1106 = vmax.f32 %v992, 0.0
        %v1107 = vmax.f32 %v997, 0.0
        %v1108 = vmax.f32 %v1002, 0.0
        %v1109 = vmax.f32 %v1007, 0.0
        %v1110 = vmax.f32 %v1012, 0.0
        %v1111 = vmax.f32 %v1017, 0.0
        %v1112 = vmax.f32 %v1022, 0.0
        %v1113 = vmax.f32 %v1027, 0.0
        %v1114 = vmax.f32 %v1032, 0.0
        %v1115 = vmax.f32 %v1037, 0.0
        %v1116 = vmax.f32 %v1042, 0.0
        %v1117 = vmax.f32 %v1047, 0.0
        %v1118 = vmax.f32 %v1052, 0.0
        %v1119 = vmax.f32 %v1057, 0.0
        %v1120 = vmax.f32 %v1062, 0.0
        %v1121 = vmax.f32 %v1067, 0.0
        %v1122 = vmax.f32 %v1072, 0.0
        %v1123 = vmax.f32 %v1077, 0.0
        %v1124 = vmax.f32 %v1082, 0.0
        %v1125 = vmax.f32 %v1087, 0.0
        %v1126 = vmax.f32 %v1092, 0.0
        %v1127 = vld [vmem:[%s5] sm:$0x1]
        %v1128 = vld [vmem:[#allocation2] sm:$0x1]
        %1130 = vset.pattern.permute.xlu0 0
        %1131 = vperm.xlu0 %1130, %v1128
        %v1132 = vpop.permute.xlu0 %1131
        %v1134 = vlaneseq
        %v1135 = vshrl.u32 %v1134, 7
        %v1136 = vsub.s32 0, %v1135
        %v1137 = vrot.slane %v1132, %v1136
        %vm1138 = vcmask 261120
        %v1140 = vsel %vm1138, %v1127, 0
        %v1143 = vsel %vm1138, %v1095, 0
        %v1146 = vsel %vm1138, %v1096, 0
        %v1149 = vsel %vm1138, %v1097, 0
        %v1152 = vsel %vm1138, %v1098, 0
        %v1155 = vsel %vm1138, %v1099, 0
        %v1158 = vsel %vm1138, %v1100, 0
        %v1161 = vsel %vm1138, %v1101, 0
        %v1164 = vsel %vm1138, %v1102, 0
        %v1167 = vsel %vm1138, %v1103, 0
        %v1170 = vsel %vm1138, %v1104, 0
        %v1173 = vsel %vm1138, %v1105, 0
        %v1176 = vsel %vm1138, %v1106, 0
        %v1179 = vsel %vm1138, %v1107, 0
        %v1182 = vsel %vm1138, %v1108, 0
        %v1185 = vsel %vm1138, %v1109, 0
        %v1188 = vsel %vm1138, %v1110, 0
        %v1191 = vsel %vm1138, %v1111, 0
        %v1194 = vsel %vm1138, %v1112, 0
        %v1197 = vsel %vm1138, %v1113, 0
        %v1200 = vsel %vm1138, %v1114, 0
        %v1203 = vsel %vm1138, %v1115, 0
        %v1206 = vsel %vm1138, %v1116, 0
        %v1209 = vsel %vm1138, %v1117, 0
        %v1212 = vsel %vm1138, %v1118, 0
        %v1215 = vsel %vm1138, %v1119, 0
        %v1218 = vsel %vm1138, %v1120, 0
        %v1221 = vsel %vm1138, %v1121, 0
        %v1224 = vsel %vm1138, %v1122, 0
        %v1227 = vsel %vm1138, %v1123, 0
        %v1230 = vsel %vm1138, %v1124, 0
        %v1233 = vsel %vm1138, %v1125, 0
        %v1236 = vsel %vm1138, %v1126, 0
        %1238 = vmatprep.subr.mxu0 0.0
        %1239 = vmatpush1.xpose.msra.mxu0 %v1188
        %1240 = vmatprep.subr.mxu0 0.0
        %1241 = vmatpush1.xpose.msra.mxu0 %v1185
        %1242 = vmatprep.subr.mxu0 0.0
        %1243 = vmatpush1.xpose.msra.mxu0 %v1182
        %1244 = vmatprep.subr.mxu0 0.0
        %1245 = vmatpush1.xpose.msra.mxu0 %v1179
        %1246 = vmatprep.subr.mxu0 0.0
        %1247 = vmatpush1.xpose.msra.mxu0 %v1176
        %1248 = vmatprep.subr.mxu0 0.0
        %1249 = vmatpush1.xpose.msra.mxu0 %v1173
        %1250 = vmatprep.subr.mxu0 0.0
        %1251 = vmatpush1.xpose.msra.mxu0 %v1170
        %1252 = vmatprep.subr.mxu0 0.0
        %1253 = vmatpush1.xpose.msra.mxu0 %v1167
        %1254 = vmatprep.subr.mxu0 0.0
        %1255 = vmatpush1.xpose.msra.mxu0 %v1164
        %1256 = vmatprep.subr.mxu0 0.0
        %1257 = vmatpush1.xpose.msra.mxu0 %v1161
        %1258 = vmatprep.subr.mxu0 0.0
        %1259 = vmatpush1.xpose.msra.mxu0 %v1158
        %1260 = vmatprep.subr.mxu0 0.0
        %1261 = vmatpush1.xpose.msra.mxu0 %v1155
        %1262 = vmatprep.subr.mxu0 0.0
        %1263 = vmatpush1.xpose.msra.mxu0 %v1152
        %1264 = vmatprep.subr.mxu0 0.0
        %1265 = vmatpush1.xpose.msra.mxu0 %v1149
        %1266 = vmatprep.subr.mxu0 0.0
        %1267 = vmatpush1.xpose.msra.mxu0 %v1146
        %1268 = vmatprep.subr.mxu0 0.0
        %1269 = vmatpush1.xpose.msra.mxu0 %v1143
        %1270 = vmatprep.subr.mxu0 0.0
        %1271 = vmatpush2.xpose.msra.mxu0 %v1236
        %1272 = vmatprep.subr.mxu0 0.0
        %1273 = vmatpush2.xpose.msra.mxu0 %v1233
        %1274 = vmatprep.subr.mxu0 0.0
        %1275 = vmatpush2.xpose.msra.mxu0 %v1230
        %1276 = vmatprep.subr.mxu0 0.0
        %1277 = vmatpush2.xpose.msra.mxu0 %v1227
        %1278 = vmatprep.subr.mxu0 0.0
        %1279 = vmatpush2.xpose.msra.mxu0 %v1224
        %1280 = vmatprep.subr.mxu0 0.0
        %1281 = vmatpush2.xpose.msra.mxu0 %v1221
        %1282 = vmatprep.subr.mxu0 0.0
        %1283 = vmatpush2.xpose.msra.mxu0 %v1218
        %1284 = vmatprep.subr.mxu0 0.0
        %1285 = vmatpush2.xpose.msra.mxu0 %v1215
        %1286 = vmatprep.subr.mxu0 0.0
        %1287 = vmatpush2.xpose.msra.mxu0 %v1212
        %1288 = vmatprep.subr.mxu0 0.0
        %1289 = vmatpush2.xpose.msra.mxu0 %v1209
        %1290 = vmatprep.subr.mxu0 0.0
        %1291 = vmatpush2.xpose.msra.mxu0 %v1206
        %1292 = vmatprep.subr.mxu0 0.0
        %1293 = vmatpush2.xpose.msra.mxu0 %v1203
        %1294 = vmatprep.subr.mxu0 0.0
        %1295 = vmatpush2.xpose.msra.mxu0 %v1200
        %1296 = vmatprep.subr.mxu0 0.0
        %1297 = vmatpush2.xpose.msra.mxu0 %v1197
        %1298 = vmatprep.subr.mxu0 0.0
        %1299 = vmatpush2.xpose.msra.mxu0 %v1194
        %1300 = vmatprep.subr.mxu0 0.0
        %1301 = vmatpush2.xpose.msra.mxu0 %v1191
        %1302 = vmatprep.mubr.f32.mxu0 0.0
        %1303 = vmatmul.mubr.f32.gmra.mxu0 %v1140
        %v1304 = vpop.f32.mrf.mxu0
        %v1305 = vadd.f32 %v1137, %v1304
        %v1306 = vpop.f32.mrf.mxu0
        %v1307 = vadd.f32 %v1137, %v1306
        %1308 = vdwg.mxu0
        %v1309 = vsub.f32 0.0, %v1305
        %v1310 = vsub.f32 0.0, %v1307
        %v1311 = vmul.f32 %v1309, 1.442695
        %v1312 = vpow.pop %v1311
        %v1313 = vmul.f32 %v1310, 1.442695
        %v1314 = vpow.pop %v1313
        %v1315 = vadd.f32 %v1312, 1.0
        %v1316 = vadd.f32 %v1314, 1.0
        %v1317 = vrcp.pop %v1315
        %v1318 = vmul.f32 1.0, %v1317
        %v1319 = vrcp.pop %v1316
        %v1320 = vmul.f32 1.0, %v1319
        %v1323 = vcombine.low %v1318, %v1320
        %v1325 = vunpack.c.l.s4 1966171168
        %v1326 = vunpack.c.0.s8 %v1325
        %v1327 = vlaneseq
        %v1328 = vshrl.u32 %v1327, 7
        %v1329 = vsub.s32 %v1326, %v1328
        %v1330 = vrot.slane %v1323, %v1329
        %v1332 = vunpack.c.l.s4 1966171168
        %v1333 = vunpack.c.0.s8 %v1332
        %v1334 = vlaneseq
        %v1335 = vshrl.u32 %v1334, 7
        %v1336 = vsub.s32 %v1333, %v1335
        %v1337 = vrot.slane %v1330, %v1336
        %v1339 = vlaneseq
        %vm1340 = vcmp.ge.s32.totalorder %v1339, 0
        %vm1341 = vcmp.lt.s32.totalorder %v1339, 256
        %vm1342 = vmand %vm1340, %vm1341
        %1343 = vst.msk [vmem:[%s291] sm:$0x3] %vm1342, %v1337
        %s1344 = sand.u32 %s183, 1
        %s1345 = scalar_lea.sflag [#allocation4], %s1344
        %s1346 = sand.u32 %s183, 1
        %s1347 = smul.addr %s1346, 2
        %s1348 = scalar_lea.vmem [#allocation3], %s1347
        // Predicated region
        $region49: #{fastnn_forward.1} parent=47 // pred_check
          %p1349 = pneg %p193
        $region50: #{fastnn_forward.1} parent=47 // pred_check_branch
          %1351 = sbr.rel (%p1349) target = $region52
        $region51: #{fastnn_forward.1} parent=47 // pred_region
          %s1353 = ssub.s32 32, 32
          %1354 = vsyncadd %s1345, %s1353
          %s1355 = smul.addr %s23, 2
          %s1356 = smul.addr %s1355, 16
          %s1357 = scalar_lea.hbm %s7, %s1356
          %s1359 = sshll.u32 %s1348, 4
          %s1360 = int_to_ptr.vmem [resolvable:$true] %s1359
          %1362 = dma.vmem_to_hbm [thread:$0]  %s1360, 32, %s1357, %s1345
        $region52: #{fastnn_forward.1} parent=47 // pred_fallthru
          _
      $region48: #{fastnn_forward.1} parent=5 // pred_fallthru
        _
      %p1363 = scmp.le.s32.totalorder 2, %s18
      // Predicated region
      $region53: #{fastnn_forward.1} parent=5 // pred_check
        %p1364 = pneg %p1363
      $region54: #{fastnn_forward.1} parent=5 // pred_check_branch
        %1366 = sbr.rel (%p1364) target = $region56
      $region55: #{fastnn_forward.1} parent=5 // pred_region
        %s1367 = ssub.s32 %s18, 2
        // Predicated region
        $region57: #{fastnn_forward.1} parent=55 // pred_check
          %p1368 = pneg %p199
        $region58: #{fastnn_forward.1} parent=55 // pred_check_branch
          %1370 = sbr.rel (%p1368) target = $region60
        $region59: #{fastnn_forward.1} parent=55 // pred_region
          %s1371 = sand.u32 %s184, 1
          %s1372 = scalar_lea.sflag [#allocation4], %s1371
          %s1373 = sand.u32 %s184, 1
          %s1374 = smul.addr %s1373, 2
          %s1375 = scalar_lea.vmem [#allocation3], %s1374
          %1376 = dma.done %s1372, 32
        $region60: #{fastnn_forward.1} parent=55 // pred_fallthru
          _
      $region56: #{fastnn_forward.1} parent=5 // pred_fallthru
        _
    $region6: #{fastnn_forward.1} parent=1 // loop_footer
      %s22 = sadd.s32 1, %s18
    $region7: #{fastnn_forward.1} parent=1 // loop_footer_branch
      %17 = sbr.rel target = $region3
    $region8: #{fastnn_forward.1} parent=1 // loop_exit
      _
    %1377 = vsyncpa [#allocation4], 1
    %s1378 = scalar_lea.sflag [#allocation4], 1
    %1379 = vsyncpa %s1378, 1

</llo_original>
